<compile_context>
chip_gen: v5e
topology: v5e:2x2
jax: 0.10.0
libtpu: 0.0.40
codegen_flags: <defaults>
</compile_context>

<pallas_src>
import functools

import jax
import jax.numpy as jnp
from jax.experimental import pallas as pl
from jax.experimental.pallas import tpu as pltpu


def _round_up(v, m):
    return ((v + m - 1) // m) * m


def _edgeconv_kernel(edge_ref, w2_ref, b2_ref, o_ref, *, n_hiddens):
    feats = edge_ref[...]                                        # [tile_e, K]
    # ReLU only the x_em columns (first n_hiddens lanes); edge_attr/edge_f pass
    # through untouched.  Lane mask -> VPU select, no lane shuffles.
    col = jax.lax.broadcasted_iota(jnp.int32, feats.shape, 1)
    act = jnp.where(col < n_hiddens, jnp.maximum(feats, 0.0), feats)
    out = jnp.dot(act, w2_ref[...], preferred_element_type=jnp.float32)
    out = out + b2_ref[...]
    o_ref[...] = out.astype(o_ref.dtype)


def edgeconvfc_forward(x, edge_index, edge_f, edge_attr, params, *, tile_e=512):
    W1, b1, W2, b2 = params["W1"], params["b1"], params["W2"], params["b2"]
    del b1  # cancels exactly in the per-edge subtraction
    N_hiddens = W1.shape[0]
    E_hiddens = W2.shape[0]
    K = W2.shape[1]                       # N_hiddens + E_in + Ef
    E = edge_index.shape[1]

    # ---- lin1 once per node (bias-free: it cancels in h_src - h_dst) ----
    h = jnp.dot(x.astype(jnp.float32), W1.T.astype(jnp.float32))       # [N, N_hiddens]

    # ---- per-edge gather + subtraction (same start_ID offset as reference) ----
    start_ID = jnp.min(edge_index[0])
    src = edge_index[0] - start_ID
    dst = edge_index[1] - start_ID
    hdiff = jnp.take(h, src, axis=0) - jnp.take(h, dst, axis=0)        # [E, N_hiddens]
    # TODO(synk): for huge graphs, prefetch src/dst via PrefetchScalarGridSpec and
    # gather node rows inside the kernel to avoid the HBM round trip of `hdiff`.

    # Single per-edge input slab: [hdiff | edge_attr | edge_f]  -> [E, K]
    edge_in = jnp.concatenate(
        [hdiff, edge_attr.astype(jnp.float32), edge_f.astype(jnp.float32)], axis=1)

    # lin2 weight pre-transposed to [K, E_hiddens]; bias as a [1, E_hiddens] row.
    W2T = W2.T.astype(jnp.float32)
    b2r = b2.reshape(1, -1).astype(jnp.float32)

    # ---- tile the edge dimension (sublanes); tile must be a multiple of 8 ----
    tile = max(8, min(_round_up(tile_e, 8), _round_up(E, 8)))
    E_pad = _round_up(E, tile)
    if E_pad > E:
        edge_in = jnp.pad(edge_in, ((0, E_pad - E), (0, 0)))

    grid = (E_pad // tile,)

    cost = pl.CostEstimate(
        flops=2 * E_pad * K * E_hiddens,
        transcendentals=0,
        bytes_accessed=4 * (E_pad * K + K * E_hiddens + E_hiddens + E_pad * E_hiddens),
    )

    out = pl.pallas_call(
        functools.partial(_edgeconv_kernel, n_hiddens=N_hiddens),
        out_shape=jax.ShapeDtypeStruct((E_pad, E_hiddens), jnp.float32),
        grid_spec=pltpu.PrefetchScalarGridSpec(
            num_scalar_prefetch=0,
            grid=grid,
            in_specs=[
                pl.BlockSpec((tile, K), lambda i: (i, 0)),           # per-edge slab
                pl.BlockSpec((K, E_hiddens), lambda i: (0, 0)),      # W2^T (resident)
                pl.BlockSpec((1, E_hiddens), lambda i: (0, 0)),      # b2
            ],
            out_specs=pl.BlockSpec((tile, E_hiddens), lambda i: (i, 0)),
        ),
        compiler_params=pltpu.CompilerParams(
            dimension_semantics=("parallel",)),
        cost_estimate=cost,
    )(edge_in, W2T, b2r)

    return out[:E]


def _reference(x, edge_index, edge_f, edge_attr, params):
    """Pure-JAX vectorized reference mirroring the PyTorch per-edge loop."""
    W1, b1, W2, b2 = params["W1"], params["b1"], params["W2"], params["b2"]
    start_ID = jnp.min(edge_index[0])
    src = edge_index[0] - start_ID
    dst = edge_index[1] - start_ID
    h_src = x[src] @ W1.T + b1
    h_dst = x[dst] @ W1.T + b1
    x_em = jax.nn.relu(h_src - h_dst)
    in_feat = jnp.concatenate([x_em, edge_attr, edge_f], axis=1)
    return in_feat @ W2.T + b2


if __name__ == "__main__":
    # small config consistent with the module's __init__
    N_in, N_hiddens = 8, 16        # lin1: N_in -> N_hiddens
    E_in, Ef = 4, 4                # per-edge attr / feature dims
    E_hiddens = 16                 # lin2 output dim
    in_channels = N_hiddens + E_in + Ef
    num_nodes, num_edges = 16, 32

    key = jax.random.PRNGKey(0)
    k = jax.random.split(key, 8)
    x = jax.random.normal(k[0], (num_nodes, N_in), dtype=jnp.float32)
    edge_index = jax.random.randint(k[1], (2, num_edges), 0, num_nodes, dtype=jnp.int32)
    edge_attr = jax.random.normal(k[2], (num_edges, E_in), dtype=jnp.float32)
    edge_f = jax.random.normal(k[3], (num_edges, Ef), dtype=jnp.float32)

    # deterministic parameter init (same shapes as nn.Linear: weight [out, in], bias [out])
    params = {
        "W1": jax.random.normal(k[4], (N_hiddens, N_in), dtype=jnp.float32) * 0.1,
        "b1": jax.random.normal(k[5], (N_hiddens,), dtype=jnp.float32) * 0.1,
        "W2": jax.random.normal(k[6], (E_hiddens, in_channels), dtype=jnp.float32) * 0.1,
        "b2": jax.random.normal(k[7], (E_hiddens,), dtype=jnp.float32) * 0.1,
    }

    out = edgeconvfc_forward(x, edge_index, edge_f, edge_attr, params)
    out = jax.block_until_ready(out)

    ref = _reference(x, edge_index, edge_f, edge_attr, params)
    assert out.shape == (num_edges, E_hiddens), out.shape
    assert jnp.allclose(out, ref, atol=1e-4, rtol=1e-4), float(jnp.max(jnp.abs(out - ref)))

    print("KERNEL_OK")
</pallas_src>

<mosaic_0001>
module attributes {stable_mosaic.version = 11 : i64} {
  func.func @_edgeconv_kernel(%arg0: i32, %arg1: memref<32x24xf32, #tpu.memory_space<vmem>>, %arg2: memref<24x16xf32, #tpu.memory_space<vmem>>, %arg3: memref<1x16xf32, #tpu.memory_space<vmem>>, %arg4: memref<32x16xf32, #tpu.memory_space<vmem>>) attributes {dimension_semantics = [#tpu.dimension_semantics<parallel>], iteration_bounds = array<i64: 1>, scalar_prefetch = 0 : i64, scratch_operands = 0 : i64, tpu.core_type = #tpu.core_type<tc>, window_params = [{transform_indices = @transform_0, window_bounds = array<i64: 32, 24>}, {pipeline_mode = #tpu.pipeline_mode<synchronous>, transform_indices = @transform_1, window_bounds = array<i64: 24, 16>}, {pipeline_mode = #tpu.pipeline_mode<synchronous>, transform_indices = @transform_2, window_bounds = array<i64: 1, 16>}, {transform_indices = @transform_3, window_bounds = array<i64: 32, 16>}]} {
    %c0 = arith.constant 0 : index
    %c0_0 = arith.constant 0 : index
    %0 = vector.load %arg1[%c0, %c0_0] : memref<32x24xf32, #tpu.memory_space<vmem>>, vector<32x24xf32>
    %1 = tpu.iota {dimensions = array<i32: 1>} : vector<32x24xi32>
    %c16_i32 = arith.constant 16 : i32
    %2 = vector.broadcast %c16_i32 : i32 to vector<32x24xi32>
    %3 = arith.cmpi slt, %1, %2 : vector<32x24xi32>
    %cst = arith.constant 0.000000e+00 : f32
    %4 = vector.broadcast %cst : f32 to vector<32x24xf32>
    %5 = arith.maximumf %0, %4 : vector<32x24xf32>
    %6 = arith.select %3, %5, %0 : vector<32x24xi1>, vector<32x24xf32>
    %c0_1 = arith.constant 0 : index
    %c0_2 = arith.constant 0 : index
    %7 = vector.load %arg2[%c0_1, %c0_2] : memref<24x16xf32, #tpu.memory_space<vmem>>, vector<24x16xf32>
    %cst_3 = arith.constant dense<0.000000e+00> : vector<32x16xf32>
    %8 = tpu.matmul %6, %7, %cst_3 {dimension_numbers = #tpu.dot_dimension_numbers<[1], [0], [0], [1], [0, 0, 1, 1], [], []>} : vector<32x24xf32>, vector<24x16xf32>, vector<32x16xf32> -> vector<32x16xf32>
    %c0_4 = arith.constant 0 : index
    %c0_5 = arith.constant 0 : index
    %9 = vector.load %arg3[%c0_4, %c0_5] : memref<1x16xf32, #tpu.memory_space<vmem>>, vector<1x16xf32>
    %10 = vector.broadcast %9 : vector<1x16xf32> to vector<32x16xf32>
    %11 = arith.addf %8, %10 : vector<32x16xf32>
    %c0_6 = arith.constant 0 : index
    %c0_7 = arith.constant 0 : index
    %12 = vector.load %arg4[%c0_6, %c0_7] : memref<32x16xf32, #tpu.memory_space<vmem>>, vector<32x16xf32>
    tpu.vector_store %arg4[%c0_6, %c0_7], %11 {strides = array<i32>} : memref<32x16xf32, #tpu.memory_space<vmem>>, vector<32x16xf32>,
    return
  }
  func.func @transform_0(%arg0: i32) -> (i32, i32) {
    %c0_i32 = arith.constant 0 : i32
    %c0_i32_0 = arith.constant 0 : i32
    return %arg0, %c0_i32 : i32, i32
  }
  func.func @transform_1(%arg0: i32) -> (i32, i32) {
    %c0_i32 = arith.constant 0 : i32
    %c0_i32_0 = arith.constant 0 : i32
    %c0_i32_1 = arith.constant 0 : i32
    return %c0_i32, %c0_i32_0 : i32, i32
  }
  func.func @transform_2(%arg0: i32) -> (i32, i32) {
    %c0_i32 = arith.constant 0 : i32
    %c0_i32_0 = arith.constant 0 : i32
    %c0_i32_1 = arith.constant 0 : i32
    return %c0_i32, %c0_i32_0 : i32, i32
  }
  func.func @transform_3(%arg0: i32) -> (i32, i32) {
    %c0_i32 = arith.constant 0 : i32
    %c0_i32_0 = arith.constant 0 : i32
    return %arg0, %c0_i32 : i32, i32
  }
}

</mosaic_0001>

<llo_original>
// kernel: tpu_custom_call.1
$region0: #{tpu_custom_call.1}
  #allocation0 [shape = 'u32[]', space=smem, size = 0x4, offset = 0x4, fixed_abs, tag = 'smem constant byte address 0x4 - core index']
  #allocation1 [shape = 'u32[72,128]{1,0:T(1,128)}', space=vmem, size = 0x9000, scoped, tag = 'internal scratch']
  %s0 = inlined_call_operand.vmem [shape: f32[32,24], index: 0, kind: input, shape index: {}]
  %s1 = inlined_call_operand.vmem [shape: f32[24,16], index: 1, kind: input, shape index: {}]
  %s2 = inlined_call_operand.vmem [shape: f32[1,16], index: 2, kind: input, shape index: {}]
  %s3 = inlined_call_operand.vmem [shape: f32[32,16], index: 3, kind: output, shape index: {}]
  %s4 = sld [smem:[#allocation0]]
  $region22: #{tpu_custom_call.1} parent=0
    _
  %s6 = ssub.s32 1, %s4
  %s7 = scalar_select 0, %s6, %s4
  // Predicated region
  $region2: #{tpu_custom_call.1} parent=0 // pred_check
    _
  $region3: #{tpu_custom_call.1} parent=0 // pred_check_branch
    %9 = sbr.rel (0) target = $region5
  $region4: #{tpu_custom_call.1} parent=0 // pred_region
    _
  $region5: #{tpu_custom_call.1} parent=0 // pred_fallthru
    _
  // Predicated region
  $region6: #{tpu_custom_call.1} parent=0 // pred_check
    _
  $region7: #{tpu_custom_call.1} parent=0 // pred_check_branch
    %11 = sbr.rel (0) target = $region9
  $region8: #{tpu_custom_call.1} parent=0 // pred_region
    _
  $region9: #{tpu_custom_call.1} parent=0 // pred_fallthru
    _
  // Predicated region
  $region10: #{tpu_custom_call.1} parent=0 // pred_check
    _
  $region11: #{tpu_custom_call.1} parent=0 // pred_check_branch
    %13 = sbr.rel (0) target = $region13
  $region12: #{tpu_custom_call.1} parent=0 // pred_region
    _
  $region13: #{tpu_custom_call.1} parent=0 // pred_fallthru
    _
  %v14 = vld [vmem:[%s0] sm:$0xff]
  %v15 = vld [vmem:[%s0 + $0x8] sm:$0xff]
  %v16 = vld [vmem:[%s0 + $0x10] sm:$0xff]
  %v17 = vld [vmem:[%s0 + $0x18] sm:$0xff]
  %v18 = vlaneseq
  %v19 = vand.u32 %v18, 127
  %vm20 = vcmp.lt.s32.totalorder %v19, 16
  %v21 = vmax.f32 %v14, 0.0
  %v22 = vmax.f32 %v15, 0.0
  %v23 = vmax.f32 %v16, 0.0
  %v24 = vmax.f32 %v17, 0.0
  %v25 = vsel %vm20, %v21, %v14
  %v26 = vsel %vm20, %v22, %v15
  %v27 = vsel %vm20, %v23, %v16
  %v28 = vsel %vm20, %v24, %v17
  %v29 = vld [vmem:[%s1] sm:$0xff]
  %v30 = vld [vmem:[%s1 + $0x8] sm:$0xff]
  %v31 = vld [vmem:[%s1 + $0x10] sm:$0xff]
  %v32 = vld [vmem:[%s2] sm:$0x1]
  %v34 = vperm.slane %v32, 0
  %vm36 = vcmask 195584
  %v38 = vsel %vm36, %v25, 0
  %v41 = vsel %vm36, %v26, 0
  %v44 = vsel %vm36, %v27, 0
  %v47 = vsel %vm36, %v28, 0
  %49 = vmatpush.msra.mxu0 0.0
  %50 = vmatpush.msra.mxu0 0.0
  %51 = vmatpush.msra.mxu0 0.0
  %52 = vmatpush.msra.mxu0 0.0
  %53 = vmatpush.msra.mxu0 0.0
  %54 = vmatpush.msra.mxu0 0.0
  %55 = vmatpush.msra.mxu0 0.0
  %56 = vmatpush.msra.mxu0 0.0
  %57 = vmatpush.msra.mxu0 0.0
  %58 = vmatpush.msra.mxu0 0.0
  %59 = vmatpush.msra.mxu0 0.0
  %60 = vmatpush.msra.mxu0 0.0
  %61 = vmatpush.msra.mxu0 0.0
  %62 = vmatpush.msra.mxu0 %v31
  %63 = vmatpush.msra.mxu0 %v30
  %64 = vmatpush.msra.mxu0 %v29
  %65 = vmatmul.f32.gmra.mxu0 %v38
  %v66 = vpop.f32.mrf.mxu0
  %v67 = vadd.f32 %v34, %v66
  %68 = vmatmul.f32.gmra.mxu0 %v41
  %v69 = vpop.f32.mrf.mxu0
  %v70 = vadd.f32 %v34, %v69
  %71 = vmatmul.f32.gmra.mxu0 %v44
  %v72 = vpop.f32.mrf.mxu0
  %v73 = vadd.f32 %v34, %v72
  %74 = vmatmul.f32.gmra.mxu0 %v47
  %v75 = vpop.f32.mrf.mxu0
  %v76 = vadd.f32 %v34, %v75
  %77 = vdwg.mxu0
  %vm78 = vcmask 130048
  %79 = vst.msk [vmem:[%s3] sm:$0xff] %vm78, %v67
  %80 = vst.msk [vmem:[%s3 + $0x8] sm:$0xff] %vm78, %v70
  %81 = vst.msk [vmem:[%s3 + $0x10] sm:$0xff] %vm78, %v73
  %82 = vst.msk [vmem:[%s3 + $0x18] sm:$0xff] %vm78, %v76
  // Predicated region
  $region14: #{tpu_custom_call.1} parent=0 // pred_check
    _
  $region15: #{tpu_custom_call.1} parent=0 // pred_check_branch
    %84 = sbr.rel (0) target = $region17
  $region16: #{tpu_custom_call.1} parent=0 // pred_region
    _
  $region17: #{tpu_custom_call.1} parent=0 // pred_fallthru
    _
  // Predicated region
  $region18: #{tpu_custom_call.1} parent=0 // pred_check
    _
  $region19: #{tpu_custom_call.1} parent=0 // pred_check_branch
    %86 = sbr.rel (0) target = $region21
  $region20: #{tpu_custom_call.1} parent=0 // pred_region
    _
  $region21: #{tpu_custom_call.1} parent=0 // pred_fallthru
    _

</llo_original>
